<compile_context>
chip_gen: v7x
topology: tpu7x:2x2x1
jax: 0.10.0
libtpu: 0.0.40
codegen_flags: <defaults>
</compile_context>

<pallas_src>
import math

import jax
import jax.numpy as jnp
from jax import lax
from jax.experimental import pallas as pl
from jax.experimental.pallas import tpu as pltpu


def _round_up(x, m):
    return ((x + m - 1) // m) * m


def lru_kernel(x_ref, win_ref, wc_ref, dt_ref, lam1_ref, lam2_ref,
               out_ref, hist_ref, state_ref):
    # x_ref:     (TC*BB, IN)   time-major rows (row = t_local*BB + bb)
    # win_ref:   (IN, 2*Sp)    [(gamma*B_re).T | (gamma*B_im).T]  (gamma folded)
    # wc_ref:    (2*Sp, OUT)   [C_re.T ; -C_im.T]
    # dt_ref:    (IN, OUT)     D.T
    # lam1_ref:  (1, 2*Sp)     [Lambda_re | Lambda_re]
    # lam2_ref:  (1, 2*Sp)     [-Lambda_im | Lambda_im]
    # out_ref:   (TC*BB, OUT)
    # hist_ref:  VMEM (TC*BB, 2*Sp) — input projection, overwritten with state history
    # state_ref: VMEM (BB, 2*Sp)    — state carried across time chunks
    BB, S2 = state_ref.shape
    TC = x_ref.shape[0] // BB
    Sp = S2 // 2

    # New sequence for this batch block: reset the carried state.
    @pl.when(pl.program_id(1) == 0)
    def _():
        state_ref[...] = jnp.zeros_like(state_ref)

    x = x_ref[...]

    # --- Phase 1: one fused MXU pass, full-slab store (no column slicing) ---
    hist_ref[...] = jnp.dot(x, win_ref[...], preferred_element_type=jnp.float32)

    # --- Phase 2: serial recurrence on the combined [re | im] state ---------
    lam1 = jnp.broadcast_to(lam1_ref[...], (BB, S2))   # hoisted out of the loop
    lam2 = jnp.broadcast_to(lam2_ref[...], (BB, S2))

    def step(i, s):
        r = pl.multiple_of(i * BB, BB)
        u = hist_ref[pl.ds(r, BB), :]
        # roll by Sp swaps the re/im halves -> cross terms via the XLU slot.
        ns = lam1 * s + lam2 * pltpu.roll(s, Sp, axis=1) + u
        hist_ref[pl.ds(r, BB), :] = ns       # overwrite projection with state
        return ns

    if TC % 8 == 0:
        unroll = 8
    elif TC % 4 == 0:
        unroll = 4
    elif TC % 2 == 0:
        unroll = 2
    else:
        unroll = 1
    state_ref[...] = lax.fori_loop(0, TC, step, state_ref[...], unroll=unroll)

    # --- Phase 3: hoisted output projection + D term, single slab store -----
    y = jnp.dot(hist_ref[...], wc_ref[...], preferred_element_type=jnp.float32)
    y = y + jnp.dot(x, dt_ref[...], preferred_element_type=jnp.float32)
    out_ref[...] = y


def lru_forward(x, B_re, B_im, C_re, C_im, D, lam_re, lam_im, gamma,
                *, block_b=32, t_chunk=128):
    """x: [B, T, IN] float32.  Returns [B, T, OUT] float32."""
    Bb, T, IN = x.shape
    S = B_re.shape[0]
    OUT = D.shape[0]

    # Pad the state so the combined [re|im] lane dim is a multiple of 128.
    Sp = _round_up(S, 64)
    S2 = 2 * Sp

    # ---- batch blocking ------------------------------------------------------
    Bp8 = _round_up(Bb, 8)
    BB = min(_round_up(block_b, 8), Bp8)
    # v7x megacore: keep >= 2 parallel batch blocks when the batch allows it so
    # both TensorCores get work; costs nothing material on v5e/v6e (1 TC).
    if (Bp8 // BB) < 2 and (Bp8 // 8) >= 2:
        BB = _round_up(pl.cdiv(Bp8, 2), 8)
    n_blocks = pl.cdiv(Bp8, BB)
    Bp = n_blocks * BB

    # ---- time chunking (second grid axis, "arbitrary") -----------------------
    t_chunk = max(8, _round_up(t_chunk, 8))
    n_tc = pl.cdiv(T, t_chunk)
    TC = _round_up(pl.cdiv(T, n_tc), 8)     # multiple of 8 -> unroll=8, min padding
    Tp = n_tc * TC

    # ---- wrapper-side layout plumbing (block-contiguous HBM tiles) -----------
    xw = x
    if Bp != Bb or Tp != T:
        xw = jnp.pad(x, ((0, Bp - Bb), (0, Tp - T), (0, 0)))
    # (Bp, Tp, IN) -> (n_blocks, Tp*BB, IN); row inside a block = t*BB + bb.
    xw = (xw.reshape(n_blocks, BB, Tp, IN)
            .transpose(0, 2, 1, 3)
            .reshape(n_blocks, Tp * BB, IN))

    # ---- fold gamma / stack + pad weights host-side ---------------------------
    def pad_s(m):            # (S, k) -> (Sp, k), zero rows for the padded states
        return jnp.pad(m, ((0, Sp - S), (0, 0)))

    w_in = jnp.concatenate([pad_s(gamma[:, None] * B_re),
                            pad_s(gamma[:, None] * B_im)], axis=0).T    # (IN, 2Sp)
    w_c = jnp.concatenate([pad_s(C_re.T), pad_s(-C_im.T)], axis=0)      # (2Sp, OUT)
    d_t = D.T                                                           # (IN, OUT)
    zpad = jnp.zeros((Sp - S,), jnp.float32)
    lre_p = jnp.concatenate([lam_re, zpad])
    lim_p = jnp.concatenate([lam_im, zpad])
    lam1 = jnp.concatenate([lre_p, lre_p]).reshape(1, S2)
    lam2 = jnp.concatenate([-lim_p, lim_p]).reshape(1, S2)

    # ---- VMEM budget (x/out double buffers + weights + scratch + temps) ------
    rows = TC * BB
    est = 4 * (2 * rows * IN + 2 * rows * OUT + 2 * rows * S2 + rows * OUT
               + 2 * (IN * S2 + S2 * OUT + IN * OUT + 2 * S2) + BB * S2)
    vmem_limit = int(min(64 << 20, max(32 << 20, 2 * est)))

    const2d = lambda shape: pl.BlockSpec(shape, lambda b, t: (0, 0))

    out = pl.pallas_call(
        lru_kernel,
        out_shape=jax.ShapeDtypeStruct((n_blocks, Tp * BB, OUT), jnp.float32),
        grid_spec=pltpu.PrefetchScalarGridSpec(
            num_scalar_prefetch=0,
            grid=(n_blocks, n_tc),
            in_specs=[
                pl.BlockSpec((None, TC * BB, IN), lambda b, t: (b, t, 0)),  # x
                const2d((IN, S2)),        # fused gamma*B
                const2d((S2, OUT)),       # stacked [C_re.T ; -C_im.T]
                const2d((IN, OUT)),       # D.T
                const2d((1, S2)),         # lam1
                const2d((1, S2)),         # lam2
            ],
            out_specs=pl.BlockSpec((None, TC * BB, OUT), lambda b, t: (b, t, 0)),
            scratch_shapes=[
                pltpu.VMEM((TC * BB, S2), jnp.float32),   # proj -> state history
                pltpu.VMEM((BB, S2), jnp.float32),        # carried state
            ],
        ),
        compiler_params=pltpu.CompilerParams(
            dimension_semantics=("parallel", "arbitrary"),
            vmem_limit_bytes=vmem_limit),
    )(xw, w_in, w_c, d_t, lam1, lam2)

    # (n_blocks, Tp*BB, OUT) -> (Bp, Tp, OUT); drop batch/time padding.
    out = (out.reshape(n_blocks, Tp, BB, OUT)
              .transpose(0, 2, 1, 3)
              .reshape(Bp, Tp, OUT))
    return out[:Bb, :T]


def init_params(key, in_features, out_features, state_features,
                rmin=0.0, rmax=1.0, max_phase=6.283):
    """Deterministic re-implementation of LRU.__init__ parameter shapes."""
    k_d, k_u1, k_u2, k_bre, k_bim, k_cre, k_cim = jax.random.split(key, 7)
    D = jax.random.normal(k_d, (out_features, in_features),
                          jnp.float32) / math.sqrt(in_features)
    u1 = jax.random.uniform(k_u1, (state_features,), jnp.float32,
                            minval=1e-4, maxval=1.0)
    u2 = jax.random.uniform(k_u2, (state_features,), jnp.float32,
                            minval=1e-4, maxval=1.0)
    nu_log = jnp.log(-0.5 * jnp.log(u1 * (rmax + rmin) * (rmax - rmin)
                                    + rmin ** 2))
    theta_log = jnp.log(max_phase * u2)
    Lambda_mod = jnp.exp(-jnp.exp(nu_log))
    gamma_log = jnp.log(jnp.sqrt(1.0 - jnp.square(Lambda_mod)))
    B_re = jax.random.normal(k_bre, (state_features, in_features),
                             jnp.float32) / math.sqrt(2 * in_features)
    B_im = jax.random.normal(k_bim, (state_features, in_features),
                             jnp.float32) / math.sqrt(2 * in_features)
    C_re = jax.random.normal(k_cre, (out_features, state_features),
                             jnp.float32) / math.sqrt(state_features)
    C_im = jax.random.normal(k_cim, (out_features, state_features),
                             jnp.float32) / math.sqrt(state_features)

    theta = jnp.exp(theta_log)
    lam_re = Lambda_mod * jnp.cos(theta)
    lam_im = Lambda_mod * jnp.sin(theta)
    gamma = jnp.exp(gamma_log)
    return dict(D=D, B_re=B_re, B_im=B_im, C_re=C_re, C_im=C_im,
                lam_re=lam_re, lam_im=lam_im, gamma=gamma)


def lru_reference(x, p):
    """Pure-JAX reference matching the PyTorch loop semantics."""
    S = p["B_re"].shape[0]

    def one_seq(xs):                                   # [T, IN]
        def step(carry, xt):
            s_re, s_im = carry
            u_re = p["gamma"] * (p["B_re"] @ xt)
            u_im = p["gamma"] * (p["B_im"] @ xt)
            ns_re = p["lam_re"] * s_re - p["lam_im"] * s_im + u_re
            ns_im = p["lam_re"] * s_im + p["lam_im"] * s_re + u_im
            y = p["C_re"] @ ns_re - p["C_im"] @ ns_im + p["D"] @ xt
            return (ns_re, ns_im), y
        init = (jnp.zeros((S,), jnp.float32), jnp.zeros((S,), jnp.float32))
        _, ys = lax.scan(step, init, xs)
        return ys

    return jax.vmap(one_seq)(x)


if __name__ == "__main__":
    key = jax.random.PRNGKey(0)
    k_param, k_x1, k_x2 = jax.random.split(key, 3)

    in_features, out_features, state_features = 16, 16, 32
    params = init_params(k_param, in_features, out_features, state_features)

    def run(x, **kw):
        out = lru_forward(x, params["B_re"], params["B_im"],
                          params["C_re"], params["C_im"], params["D"],
                          params["lam_re"], params["lam_im"], params["gamma"],
                          **kw)
        return jax.block_until_ready(out)

    # Case 1: single batch block, single time chunk.
    x1 = jax.random.normal(k_x1, (2, 8, in_features), jnp.float32)
    out1 = run(x1)
    ref1 = jax.block_until_ready(lru_reference(x1, params))
    assert out1.shape == (2, 8, out_features)
    assert jnp.allclose(out1, ref1, atol=1e-4, rtol=1e-4), "mismatch (case 1)"

    # Case 2: 2 batch blocks (10 -> 16 padded), 2 time chunks with time padding
    # (12 -> 16), exercising the cross-chunk state carry and the 2-D grid.
    x2 = jax.random.normal(k_x2, (10, 12, in_features), jnp.float32)
    out2 = run(x2, t_chunk=8)
    ref2 = jax.block_until_ready(lru_reference(x2, params))
    assert out2.shape == (10, 12, out_features)
    assert jnp.allclose(out2, ref2, atol=1e-4, rtol=1e-4), "mismatch (case 2)"

    print("KERNEL_OK")
</pallas_src>

<mosaic_0001>
module attributes {stable_mosaic.version = 11 : i64} {
  func.func @lru_kernel(%arg0: i32, %arg1: i32, %arg2: memref<1x64x16xf32, #tpu.memory_space<vmem>>, %arg3: memref<16x128xf32, #tpu.memory_space<vmem>>, %arg4: memref<128x16xf32, #tpu.memory_space<vmem>>, %arg5: memref<16x16xf32, #tpu.memory_space<vmem>>, %arg6: memref<1x128xf32, #tpu.memory_space<vmem>>, %arg7: memref<1x128xf32, #tpu.memory_space<vmem>>, %arg8: memref<1x64x16xf32, #tpu.memory_space<vmem>>, %arg9: memref<64x128xf32, #tpu.memory_space<vmem>>, %arg10: memref<8x128xf32, #tpu.memory_space<vmem>>) attributes {dimension_semantics = [#tpu.dimension_semantics<parallel>, #tpu.dimension_semantics<arbitrary>], iteration_bounds = array<i64: 1, 1>, scalar_prefetch = 0 : i64, scratch_operands = 2 : i64, tpu.core_type = #tpu.core_type<tc>, window_params = [{transform_indices = @transform_0, window_bounds = array<i64: 1, 64, 16>}, {pipeline_mode = #tpu.pipeline_mode<synchronous>, transform_indices = @transform_1, window_bounds = array<i64: 16, 128>}, {pipeline_mode = #tpu.pipeline_mode<synchronous>, transform_indices = @transform_2, window_bounds = array<i64: 128, 16>}, {pipeline_mode = #tpu.pipeline_mode<synchronous>, transform_indices = @transform_3, window_bounds = array<i64: 16, 16>}, {pipeline_mode = #tpu.pipeline_mode<synchronous>, transform_indices = @transform_4, window_bounds = array<i64: 1, 128>}, {pipeline_mode = #tpu.pipeline_mode<synchronous>, transform_indices = @transform_5, window_bounds = array<i64: 1, 128>}, {transform_indices = @transform_6, window_bounds = array<i64: 1, 64, 16>}]} {
    %c0_i32 = arith.constant 0 : i32
    %0 = arith.cmpi eq, %arg1, %c0_i32 : i32
    %1 = arith.extui %0 : i1 to i32
    %c0_i32_0 = arith.constant 0 : i32
    %2 = arith.cmpi ne, %1, %c0_i32_0 : i32
    scf.if %2 {
      %cst_58 = arith.constant 0.000000e+00 : f32
      %113 = vector.broadcast %cst_58 : f32 to vector<8x128xf32>
      %c0_59 = arith.constant 0 : index
      %c0_60 = arith.constant 0 : index
      %114 = vector.load %arg10[%c0_59, %c0_60] : memref<8x128xf32, #tpu.memory_space<vmem>>, vector<8x128xf32>
      tpu.vector_store %arg10[%c0_59, %c0_60], %113 {strides = array<i32>} : memref<8x128xf32, #tpu.memory_space<vmem>>, vector<8x128xf32>,
    } else {
    }
    %c0 = arith.constant 0 : index
    %c0_1 = arith.constant 0 : index
    %c0_2 = arith.constant 0 : index
    %3 = vector.load %arg2[%c0, %c0_1, %c0_2] : memref<1x64x16xf32, #tpu.memory_space<vmem>>, vector<1x64x16xf32>
    %4 = vector.shape_cast %3 : vector<1x64x16xf32> to vector<64x16xf32>
    %c0_3 = arith.constant 0 : index
    %c0_4 = arith.constant 0 : index
    %5 = vector.load %arg3[%c0_3, %c0_4] : memref<16x128xf32, #tpu.memory_space<vmem>>, vector<16x128xf32>
    %cst = arith.constant dense<0.000000e+00> : vector<64x128xf32>
    %6 = tpu.matmul %4, %5, %cst {dimension_numbers = #tpu.dot_dimension_numbers<[1], [0], [0], [1], [0, 0, 1, 1], [], []>} : vector<64x16xf32>, vector<16x128xf32>, vector<64x128xf32> -> vector<64x128xf32>
    %c0_5 = arith.constant 0 : index
    %c0_6 = arith.constant 0 : index
    %7 = vector.load %arg9[%c0_5, %c0_6] : memref<64x128xf32, #tpu.memory_space<vmem>>, vector<64x128xf32>
    tpu.vector_store %arg9[%c0_5, %c0_6], %6 {strides = array<i32>} : memref<64x128xf32, #tpu.memory_space<vmem>>, vector<64x128xf32>,
    %c0_7 = arith.constant 0 : index
    %c0_8 = arith.constant 0 : index
    %8 = vector.load %arg6[%c0_7, %c0_8] : memref<1x128xf32, #tpu.memory_space<vmem>>, vector<1x128xf32>
    %9 = vector.shape_cast %8 : vector<1x128xf32> to vector<1x128xf32>
    %10 = vector.broadcast %9 : vector<1x128xf32> to vector<8x128xf32>
    %c0_9 = arith.constant 0 : index
    %c0_10 = arith.constant 0 : index
    %11 = vector.load %arg7[%c0_9, %c0_10] : memref<1x128xf32, #tpu.memory_space<vmem>>, vector<1x128xf32>
    %12 = vector.shape_cast %11 : vector<1x128xf32> to vector<1x128xf32>
    %13 = vector.broadcast %12 : vector<1x128xf32> to vector<8x128xf32>
    %c0_11 = arith.constant 0 : index
    %c0_12 = arith.constant 0 : index
    %14 = vector.load %arg10[%c0_11, %c0_12] : memref<8x128xf32, #tpu.memory_space<vmem>>, vector<8x128xf32>
    %c0_i32_13 = arith.constant 0 : i32
    %c8_i32 = arith.constant 8 : i32
    %15 = arith.muli %c0_i32_13, %c8_i32 : i32
    %16 = tpu.assume_multiple %15, 8 : i32
    %17 = arith.index_cast %16 : i32 to index
    %c0_14 = arith.constant 0 : index
    %18 = vector.load %arg9[%17, %c0_14] : memref<64x128xf32, #tpu.memory_space<vmem>>, vector<8x128xf32>
    %19 = arith.mulf %10, %14 : vector<8x128xf32>
    %c64_i32 = arith.constant 64 : i32
    %20 = tpu.dynamic_rotate %14 by %c64_i32 dim 1 : vector<8x128xf32>, i32 -> vector<8x128xf32>
    %21 = arith.mulf %13, %20 : vector<8x128xf32>
    %22 = arith.addf %19, %21 : vector<8x128xf32>
    %23 = arith.addf %22, %18 : vector<8x128xf32>
    %24 = arith.index_cast %16 : i32 to index
    %c0_15 = arith.constant 0 : index
    %25 = vector.load %arg9[%24, %c0_15] : memref<64x128xf32, #tpu.memory_space<vmem>>, vector<8x128xf32>
    tpu.vector_store %arg9[%24, %c0_15], %23 {strides = array<i32>} : memref<64x128xf32, #tpu.memory_space<vmem>>, vector<8x128xf32>,
    %c1_i32 = arith.constant 1 : i32
    %c8_i32_16 = arith.constant 8 : i32
    %26 = arith.muli %c1_i32, %c8_i32_16 : i32
    %27 = tpu.assume_multiple %26, 8 : i32
    %28 = arith.index_cast %27 : i32 to index
    %c0_17 = arith.constant 0 : index
    %29 = vector.load %arg9[%28, %c0_17] : memref<64x128xf32, #tpu.memory_space<vmem>>, vector<8x128xf32>
    %30 = arith.mulf %10, %23 : vector<8x128xf32>
    %c64_i32_18 = arith.constant 64 : i32
    %31 = tpu.dynamic_rotate %23 by %c64_i32_18 dim 1 : vector<8x128xf32>, i32 -> vector<8x128xf32>
    %32 = arith.mulf %13, %31 : vector<8x128xf32>
    %33 = arith.addf %30, %32 : vector<8x128xf32>
    %34 = arith.addf %33, %29 : vector<8x128xf32>
    %35 = arith.index_cast %27 : i32 to index
    %c0_19 = arith.constant 0 : index
    %36 = vector.load %arg9[%35, %c0_19] : memref<64x128xf32, #tpu.memory_space<vmem>>, vector<8x128xf32>
    tpu.vector_store %arg9[%35, %c0_19], %34 {strides = array<i32>} : memref<64x128xf32, #tpu.memory_space<vmem>>, vector<8x128xf32>,
    %c2_i32 = arith.constant 2 : i32
    %c8_i32_20 = arith.constant 8 : i32
    %37 = arith.muli %c2_i32, %c8_i32_20 : i32
    %38 = tpu.assume_multiple %37, 8 : i32
    %39 = arith.index_cast %38 : i32 to index
    %c0_21 = arith.constant 0 : index
    %40 = vector.load %arg9[%39, %c0_21] : memref<64x128xf32, #tpu.memory_space<vmem>>, vector<8x128xf32>
    %41 = arith.mulf %10, %34 : vector<8x128xf32>
    %c64_i32_22 = arith.constant 64 : i32
    %42 = tpu.dynamic_rotate %34 by %c64_i32_22 dim 1 : vector<8x128xf32>, i32 -> vector<8x128xf32>
    %43 = arith.mulf %13, %42 : vector<8x128xf32>
    %44 = arith.addf %41, %43 : vector<8x128xf32>
    %45 = arith.addf %44, %40 : vector<8x128xf32>
    %46 = arith.index_cast %38 : i32 to index
    %c0_23 = arith.constant 0 : index
    %47 = vector.load %arg9[%46, %c0_23] : memref<64x128xf32, #tpu.memory_space<vmem>>, vector<8x128xf32>
    tpu.vector_store %arg9[%46, %c0_23], %45 {strides = array<i32>} : memref<64x128xf32, #tpu.memory_space<vmem>>, vector<8x128xf32>,
    %c3_i32 = arith.constant 3 : i32
    %c8_i32_24 = arith.constant 8 : i32
    %48 = arith.muli %c3_i32, %c8_i32_24 : i32
    %49 = tpu.assume_multiple %48, 8 : i32
    %50 = arith.index_cast %49 : i32 to index
    %c0_25 = arith.constant 0 : index
    %51 = vector.load %arg9[%50, %c0_25] : memref<64x128xf32, #tpu.memory_space<vmem>>, vector<8x128xf32>
    %52 = arith.mulf %10, %45 : vector<8x128xf32>
    %c64_i32_26 = arith.constant 64 : i32
    %53 = tpu.dynamic_rotate %45 by %c64_i32_26 dim 1 : vector<8x128xf32>, i32 -> vector<8x128xf32>
    %54 = arith.mulf %13, %53 : vector<8x128xf32>
    %55 = arith.addf %52, %54 : vector<8x128xf32>
    %56 = arith.addf %55, %51 : vector<8x128xf32>
    %57 = arith.index_cast %49 : i32 to index
    %c0_27 = arith.constant 0 : index
    %58 = vector.load %arg9[%57, %c0_27] : memref<64x128xf32, #tpu.memory_space<vmem>>, vector<8x128xf32>
    tpu.vector_store %arg9[%57, %c0_27], %56 {strides = array<i32>} : memref<64x128xf32, #tpu.memory_space<vmem>>, vector<8x128xf32>,
    %c4_i32 = arith.constant 4 : i32
    %c8_i32_28 = arith.constant 8 : i32
    %59 = arith.muli %c4_i32, %c8_i32_28 : i32
    %60 = tpu.assume_multiple %59, 8 : i32
    %61 = arith.index_cast %60 : i32 to index
    %c0_29 = arith.constant 0 : index
    %62 = vector.load %arg9[%61, %c0_29] : memref<64x128xf32, #tpu.memory_space<vmem>>, vector<8x128xf32>
    %63 = arith.mulf %10, %56 : vector<8x128xf32>
    %c64_i32_30 = arith.constant 64 : i32
    %64 = tpu.dynamic_rotate %56 by %c64_i32_30 dim 1 : vector<8x128xf32>, i32 -> vector<8x128xf32>
    %65 = arith.mulf %13, %64 : vector<8x128xf32>
    %66 = arith.addf %63, %65 : vector<8x128xf32>
    %67 = arith.addf %66, %62 : vector<8x128xf32>
    %68 = arith.index_cast %60 : i32 to index
    %c0_31 = arith.constant 0 : index
    %69 = vector.load %arg9[%68, %c0_31] : memref<64x128xf32, #tpu.memory_space<vmem>>, vector<8x128xf32>
    tpu.vector_store %arg9[%68, %c0_31], %67 {strides = array<i32>} : memref<64x128xf32, #tpu.memory_space<vmem>>, vector<8x128xf32>,
    %c5_i32 = arith.constant 5 : i32
    %c8_i32_32 = arith.constant 8 : i32
    %70 = arith.muli %c5_i32, %c8_i32_32 : i32
    %71 = tpu.assume_multiple %70, 8 : i32
    %72 = arith.index_cast %71 : i32 to index
    %c0_33 = arith.constant 0 : index
    %73 = vector.load %arg9[%72, %c0_33] : memref<64x128xf32, #tpu.memory_space<vmem>>, vector<8x128xf32>
    %74 = arith.mulf %10, %67 : vector<8x128xf32>
    %c64_i32_34 = arith.constant 64 : i32
    %75 = tpu.dynamic_rotate %67 by %c64_i32_34 dim 1 : vector<8x128xf32>, i32 -> vector<8x128xf32>
    %76 = arith.mulf %13, %75 : vector<8x128xf32>
    %77 = arith.addf %74, %76 : vector<8x128xf32>
    %78 = arith.addf %77, %73 : vector<8x128xf32>
    %79 = arith.index_cast %71 : i32 to index
    %c0_35 = arith.constant 0 : index
    %80 = vector.load %arg9[%79, %c0_35] : memref<64x128xf32, #tpu.memory_space<vmem>>, vector<8x128xf32>
    tpu.vector_store %arg9[%79, %c0_35], %78 {strides = array<i32>} : memref<64x128xf32, #tpu.memory_space<vmem>>, vector<8x128xf32>,
    %c6_i32 = arith.constant 6 : i32
    %c8_i32_36 = arith.constant 8 : i32
    %81 = arith.muli %c6_i32, %c8_i32_36 : i32
    %82 = tpu.assume_multiple %81, 8 : i32
    %83 = arith.index_cast %82 : i32 to index
    %c0_37 = arith.constant 0 : index
    %84 = vector.load %arg9[%83, %c0_37] : memref<64x128xf32, #tpu.memory_space<vmem>>, vector<8x128xf32>
    %85 = arith.mulf %10, %78 : vector<8x128xf32>
    %c64_i32_38 = arith.constant 64 : i32
    %86 = tpu.dynamic_rotate %78 by %c64_i32_38 dim 1 : vector<8x128xf32>, i32 -> vector<8x128xf32>
    %87 = arith.mulf %13, %86 : vector<8x128xf32>
    %88 = arith.addf %85, %87 : vector<8x128xf32>
    %89 = arith.addf %88, %84 : vector<8x128xf32>
    %90 = arith.index_cast %82 : i32 to index
    %c0_39 = arith.constant 0 : index
    %91 = vector.load %arg9[%90, %c0_39] : memref<64x128xf32, #tpu.memory_space<vmem>>, vector<8x128xf32>
    tpu.vector_store %arg9[%90, %c0_39], %89 {strides = array<i32>} : memref<64x128xf32, #tpu.memory_space<vmem>>, vector<8x128xf32>,
    %c7_i32 = arith.constant 7 : i32
    %c8_i32_40 = arith.constant 8 : i32
    %92 = arith.muli %c7_i32, %c8_i32_40 : i32
    %93 = tpu.assume_multiple %92, 8 : i32
    %94 = arith.index_cast %93 : i32 to index
    %c0_41 = arith.constant 0 : index
    %95 = vector.load %arg9[%94, %c0_41] : memref<64x128xf32, #tpu.memory_space<vmem>>, vector<8x128xf32>
    %96 = arith.mulf %10, %89 : vector<8x128xf32>
    %c64_i32_42 = arith.constant 64 : i32
    %97 = tpu.dynamic_rotate %89 by %c64_i32_42 dim 1 : vector<8x128xf32>, i32 -> vector<8x128xf32>
    %98 = arith.mulf %13, %97 : vector<8x128xf32>
    %99 = arith.addf %96, %98 : vector<8x128xf32>
    %100 = arith.addf %99, %95 : vector<8x128xf32>
    %101 = arith.index_cast %93 : i32 to index
    %c0_43 = arith.constant 0 : index
    %102 = vector.load %arg9[%101, %c0_43] : memref<64x128xf32, #tpu.memory_space<vmem>>, vector<8x128xf32>
    tpu.vector_store %arg9[%101, %c0_43], %100 {strides = array<i32>} : memref<64x128xf32, #tpu.memory_space<vmem>>, vector<8x128xf32>,
    %c8_i32_44 = arith.constant 8 : i32
    %c0_45 = arith.constant 0 : index
    %c0_46 = arith.constant 0 : index
    %103 = vector.load %arg10[%c0_45, %c0_46] : memref<8x128xf32, #tpu.memory_space<vmem>>, vector<8x128xf32>
    tpu.vector_store %arg10[%c0_45, %c0_46], %100 {strides = array<i32>} : memref<8x128xf32, #tpu.memory_space<vmem>>, vector<8x128xf32>,
    %c0_47 = arith.constant 0 : index
    %c0_48 = arith.constant 0 : index
    %104 = vector.load %arg9[%c0_47, %c0_48] : memref<64x128xf32, #tpu.memory_space<vmem>>, vector<64x128xf32>
    %c0_49 = arith.constant 0 : index
    %c0_50 = arith.constant 0 : index
    %105 = vector.load %arg4[%c0_49, %c0_50] : memref<128x16xf32, #tpu.memory_space<vmem>>, vector<128x16xf32>
    %cst_51 = arith.constant dense<0.000000e+00> : vector<64x16xf32>
    %106 = tpu.matmul %104, %105, %cst_51 {dimension_numbers = #tpu.dot_dimension_numbers<[1], [0], [0], [1], [0, 0, 1, 1], [], []>} : vector<64x128xf32>, vector<128x16xf32>, vector<64x16xf32> -> vector<64x16xf32>
    %c0_52 = arith.constant 0 : index
    %c0_53 = arith.constant 0 : index
    %107 = vector.load %arg5[%c0_52, %c0_53] : memref<16x16xf32, #tpu.memory_space<vmem>>, vector<16x16xf32>
    %cst_54 = arith.constant dense<0.000000e+00> : vector<64x16xf32>
    %108 = tpu.matmul %4, %107, %cst_54 {dimension_numbers = #tpu.dot_dimension_numbers<[1], [0], [0], [1], [0, 0, 1, 1], [], []>} : vector<64x16xf32>, vector<16x16xf32>, vector<64x16xf32> -> vector<64x16xf32>
    %109 = arith.addf %106, %108 : vector<64x16xf32>
    %c0_55 = arith.constant 0 : index
    %c0_56 = arith.constant 0 : index
    %c0_57 = arith.constant 0 : index
    %110 = vector.load %arg8[%c0_55, %c0_56, %c0_57] : memref<1x64x16xf32, #tpu.memory_space<vmem>>, vector<1x64x16xf32>
    %111 = vector.shape_cast %110 : vector<1x64x16xf32> to vector<64x16xf32>
    %112 = vector.shape_cast %109 : vector<64x16xf32> to vector<1x64x16xf32>
    tpu.vector_store %arg8[%c0_55, %c0_56, %c0_57], %112 {strides = array<i32>} : memref<1x64x16xf32, #tpu.memory_space<vmem>>, vector<1x64x16xf32>,
    return
  }
  func.func @transform_0(%arg0: i32, %arg1: i32) -> (i32, i32, i32) {
    %c0_i32 = arith.constant 0 : i32
    %c0_i32_0 = arith.constant 0 : i32
    return %arg0, %arg1, %c0_i32 : i32, i32, i32
  }
  func.func @transform_1(%arg0: i32, %arg1: i32) -> (i32, i32) {
    %c0_i32 = arith.constant 0 : i32
    %c0_i32_0 = arith.constant 0 : i32
    %c0_i32_1 = arith.constant 0 : i32
    return %c0_i32, %c0_i32_0 : i32, i32
  }
  func.func @transform_2(%arg0: i32, %arg1: i32) -> (i32, i32) {
    %c0_i32 = arith.constant 0 : i32
    %c0_i32_0 = arith.constant 0 : i32
    %c0_i32_1 = arith.constant 0 : i32
    return %c0_i32, %c0_i32_0 : i32, i32
  }
  func.func @transform_3(%arg0: i32, %arg1: i32) -> (i32, i32) {
    %c0_i32 = arith.constant 0 : i32
    %c0_i32_0 = arith.constant 0 : i32
    %c0_i32_1 = arith.constant 0 : i32
    return %c0_i32, %c0_i32_0 : i32, i32
  }
  func.func @transform_4(%arg0: i32, %arg1: i32) -> (i32, i32) {
    %c0_i32 = arith.constant 0 : i32
    %c0_i32_0 = arith.constant 0 : i32
    %c0_i32_1 = arith.constant 0 : i32
    return %c0_i32, %c0_i32_0 : i32, i32
  }
  func.func @transform_5(%arg0: i32, %arg1: i32) -> (i32, i32) {
    %c0_i32 = arith.constant 0 : i32
    %c0_i32_0 = arith.constant 0 : i32
    %c0_i32_1 = arith.constant 0 : i32
    return %c0_i32, %c0_i32_0 : i32, i32
  }
  func.func @transform_6(%arg0: i32, %arg1: i32) -> (i32, i32, i32) {
    %c0_i32 = arith.constant 0 : i32
    %c0_i32_0 = arith.constant 0 : i32
    return %arg0, %arg1, %c0_i32 : i32, i32, i32
  }
}

</mosaic_0001>

<llo_original>
// kernel: tpu_custom_call.1
$region0: #{tpu_custom_call.1}
  #allocation0 [shape = 'u32[]', space=smem, size = 0x4, offset = 0x4, fixed_abs, tag = 'smem constant byte address 0x4 - core index']
  #allocation1 [shape = 'u32[144,128]{1,0:T(1,128)}', space=vmem, size = 0x12000, scoped, tag = 'internal scratch']
  #allocation2 [shape = 'f32[64,128]{1,0:T(8,128)}', space=vmem, size = 0x8000, scoped, tag = 'scratch operand']
  #allocation3 [shape = 'f32[8,128]{1,0:T(8,128)}', space=vmem, size = 0x1000, scoped, tag = 'scratch operand']
  %s0 = inlined_call_operand.vmem [shape: f32[1,64,16], index: 0, kind: input, shape index: {}]
  %s1 = inlined_call_operand.vmem [shape: f32[16,128], index: 1, kind: input, shape index: {}]
  %s2 = inlined_call_operand.vmem [shape: f32[128,16], index: 2, kind: input, shape index: {}]
  %s3 = inlined_call_operand.vmem [shape: f32[16,16], index: 3, kind: input, shape index: {}]
  %s4 = inlined_call_operand.vmem [shape: f32[1,128], index: 4, kind: input, shape index: {}]
  %s5 = inlined_call_operand.vmem [shape: f32[1,128], index: 5, kind: input, shape index: {}]
  %s6 = inlined_call_operand.vmem [shape: f32[1,64,16], index: 6, kind: output, shape index: {}]
  %s7 = sld [smem:[#allocation0]]
  $region38: #{tpu_custom_call.1} parent=0
    _
  %s9 = ssub.s32 1, %s7
  %s10 = scalar_select 0, %s9, %s7
  // Predicated region
  $region2: #{tpu_custom_call.1} parent=0 // pred_check
    _
  $region3: #{tpu_custom_call.1} parent=0 // pred_check_branch
    %12 = sbr.rel (0) target = $region5
  $region4: #{tpu_custom_call.1} parent=0 // pred_region
    _
  $region5: #{tpu_custom_call.1} parent=0 // pred_fallthru
    _
  // Predicated region
  $region6: #{tpu_custom_call.1} parent=0 // pred_check
    _
  $region7: #{tpu_custom_call.1} parent=0 // pred_check_branch
    %14 = sbr.rel (0) target = $region9
  $region8: #{tpu_custom_call.1} parent=0 // pred_region
    _
  $region9: #{tpu_custom_call.1} parent=0 // pred_fallthru
    _
  // Predicated region
  $region10: #{tpu_custom_call.1} parent=0 // pred_check
    _
  $region11: #{tpu_custom_call.1} parent=0 // pred_check_branch
    %16 = sbr.rel (0) target = $region13
  $region12: #{tpu_custom_call.1} parent=0 // pred_region
    _
  $region13: #{tpu_custom_call.1} parent=0 // pred_fallthru
    _
  // Predicated region
  $region14: #{tpu_custom_call.1} parent=0 // pred_check
    _
  $region15: #{tpu_custom_call.1} parent=0 // pred_check_branch
    %18 = sbr.rel (0) target = $region17
  $region16: #{tpu_custom_call.1} parent=0 // pred_region
    _
  $region17: #{tpu_custom_call.1} parent=0 // pred_fallthru
    _
  // Predicated region
  $region18: #{tpu_custom_call.1} parent=0 // pred_check
    _
  $region19: #{tpu_custom_call.1} parent=0 // pred_check_branch
    %20 = sbr.rel (0) target = $region21
  $region20: #{tpu_custom_call.1} parent=0 // pred_region
    _
  $region21: #{tpu_custom_call.1} parent=0 // pred_fallthru
    _
  // Predicated region
  $region22: #{tpu_custom_call.1} parent=0 // pred_check
    _
  $region23: #{tpu_custom_call.1} parent=0 // pred_check_branch
    %22 = sbr.rel (0) target = $region25
  $region24: #{tpu_custom_call.1} parent=0 // pred_region
    _
  $region25: #{tpu_custom_call.1} parent=0 // pred_fallthru
    _
  %p23 = scmp.eq.s32.totalorder 0, 0
  // Predicated region
  $region26: #{tpu_custom_call.1} parent=0 // pred_check
    %p24 = pneg %p23
  $region27: #{tpu_custom_call.1} parent=0 // pred_check_branch
    %26 = sbr.rel (%p24) target = $region29
  $region28: #{tpu_custom_call.1} parent=0 // pred_region
    %27 = vst [vmem:[#allocation3] sm:$0xff] 0.0
  $region29: #{tpu_custom_call.1} parent=0 // pred_fallthru
    _
  %v28 = vld [vmem:[%s0] sm:$0xff]
  %v29 = vld [vmem:[%s0 + $0x8] sm:$0xff]
  %v30 = vld [vmem:[%s0 + $0x10] sm:$0xff]
  %v31 = vld [vmem:[%s0 + $0x18] sm:$0xff]
  %v32 = vld [vmem:[%s0 + $0x20] sm:$0xff]
  %v33 = vld [vmem:[%s0 + $0x28] sm:$0xff]
  %v34 = vld [vmem:[%s0 + $0x30] sm:$0xff]
  %v35 = vld [vmem:[%s0 + $0x38] sm:$0xff]
  %v36 = vld [vmem:[%s1] sm:$0xff]
  %v37 = vld [vmem:[%s1 + $0x8] sm:$0xff]
  %vm38 = vcmask 130048
  %v40 = vsel %vm38, %v28, 0
  %v43 = vsel %vm38, %v29, 0
  %v46 = vsel %vm38, %v30, 0
  %v49 = vsel %vm38, %v31, 0
  %v52 = vsel %vm38, %v32, 0
  %v55 = vsel %vm38, %v33, 0
  %v58 = vsel %vm38, %v34, 0
  %v61 = vsel %vm38, %v35, 0
  %63 = vmatprep.subr.mxu0 0.0
  %64 = vmatpush1.msra.mxu0 %v36
  %65 = vmatprep.subr.mxu0 0.0
  %66 = vmatpush1.msra.mxu0 %v37
  %67 = vmatprep.subr.mxu0 0.0
  %68 = vmatpush1.msra.mxu0 0.0
  %69 = vmatprep.subr.mxu0 0.0
  %70 = vmatpush1.msra.mxu0 0.0
  %71 = vmatprep.subr.mxu0 0.0
  %72 = vmatpush1.msra.mxu0 0.0
  %73 = vmatprep.subr.mxu0 0.0
  %74 = vmatpush1.msra.mxu0 0.0
  %75 = vmatprep.subr.mxu0 0.0
  %76 = vmatpush1.msra.mxu0 0.0
  %77 = vmatprep.subr.mxu0 0.0
  %78 = vmatpush1.msra.mxu0 0.0
  %79 = vmatprep.subr.mxu0 0.0
  %80 = vmatpush1.msra.mxu0 0.0
  %81 = vmatprep.subr.mxu0 0.0
  %82 = vmatpush1.msra.mxu0 0.0
  %83 = vmatprep.subr.mxu0 0.0
  %84 = vmatpush1.msra.mxu0 0.0
  %85 = vmatprep.subr.mxu0 0.0
  %86 = vmatpush1.msra.mxu0 0.0
  %87 = vmatprep.subr.mxu0 0.0
  %88 = vmatpush1.msra.mxu0 0.0
  %89 = vmatprep.subr.mxu0 0.0
  %90 = vmatpush1.msra.mxu0 0.0
  %91 = vmatprep.subr.mxu0 0.0
  %92 = vmatpush1.msra.mxu0 0.0
  %93 = vmatprep.subr.mxu0 0.0
  %94 = vmatpush1.msra.mxu0 0.0
  %95 = vmatprep.subr.mxu0 0.0
  %96 = vmatpush1.msra.mxu0 0.0
  %97 = vmatprep.subr.mxu0 0.0
  %98 = vmatpush1.msra.mxu0 0.0
  %99 = vmatprep.subr.mxu0 0.0
  %100 = vmatpush1.msra.mxu0 0.0
  %101 = vmatprep.subr.mxu0 0.0
  %102 = vmatpush1.msra.mxu0 0.0
  %103 = vmatprep.subr.mxu0 0.0
  %104 = vmatpush1.msra.mxu0 0.0
  %105 = vmatprep.subr.mxu0 0.0
  %106 = vmatpush1.msra.mxu0 0.0
  %107 = vmatprep.subr.mxu0 0.0
  %108 = vmatpush1.msra.mxu0 0.0
  %109 = vmatprep.subr.mxu0 0.0
  %110 = vmatpush1.msra.mxu0 0.0
  %111 = vmatprep.subr.mxu0 0.0
  %112 = vmatpush1.msra.mxu0 0.0
  %113 = vmatprep.subr.mxu0 0.0
  %114 = vmatpush1.msra.mxu0 0.0
  %115 = vmatprep.subr.mxu0 0.0
  %116 = vmatpush1.msra.mxu0 0.0
  %117 = vmatprep.subr.mxu0 0.0
  %118 = vmatpush1.msra.mxu0 0.0
  %119 = vmatprep.subr.mxu0 0.0
  %120 = vmatpush1.msra.mxu0 0.0
  %121 = vmatprep.subr.mxu0 0.0
  %122 = vmatpush1.msra.mxu0 0.0
  %123 = vmatprep.subr.mxu0 0.0
  %124 = vmatpush1.msra.mxu0 0.0
  %125 = vmatprep.subr.mxu0 0.0
  %126 = vmatpush1.msra.mxu0 0.0
  %127 = vmatprep.mubr.f32.mxu0 0.0
  %128 = vmatmul.mubr.f32.gmra.mrb[0].mxu0 %v40
  %v129 = vpop.f32.mrb[0].mxu0
  %v130 = vadd.f32 0.0, %v129
  %v131 = vpop.f32.mrb[0].mxu0
  %132 = vmatprep.mubr.f32.mxu0 0.0
  %133 = vmatmul.mubr.f32.gmra.mrb[0].mxu0 %v43
  %v134 = vpop.f32.mrb[0].mxu0
  %v135 = vadd.f32 0.0, %v134
  %v136 = vpop.f32.mrb[0].mxu0
  %137 = vmatprep.mubr.f32.mxu0 0.0
  %138 = vmatmul.mubr.f32.gmra.mrb[0].mxu0 %v46
  %v139 = vpop.f32.mrb[0].mxu0
  %v140 = vadd.f32 0.0, %v139
  %v141 = vpop.f32.mrb[0].mxu0
  %142 = vmatprep.mubr.f32.mxu0 0.0
  %143 = vmatmul.mubr.f32.gmra.mrb[0].mxu0 %v49
  %v144 = vpop.f32.mrb[0].mxu0
  %v145 = vadd.f32 0.0, %v144
  %v146 = vpop.f32.mrb[0].mxu0
  %147 = vmatprep.mubr.f32.mxu0 0.0
  %148 = vmatmul.mubr.f32.gmra.mrb[0].mxu0 %v52
  %v149 = vpop.f32.mrb[0].mxu0
  %v150 = vadd.f32 0.0, %v149
  %v151 = vpop.f32.mrb[0].mxu0
  %152 = vmatprep.mubr.f32.mxu0 0.0
  %153 = vmatmul.mubr.f32.gmra.mrb[0].mxu0 %v55
  %v154 = vpop.f32.mrb[0].mxu0
  %v155 = vadd.f32 0.0, %v154
  %v156 = vpop.f32.mrb[0].mxu0
  %157 = vmatprep.mubr.f32.mxu0 0.0
  %158 = vmatmul.mubr.f32.gmra.mrb[0].mxu0 %v58
  %v159 = vpop.f32.mrb[0].mxu0
  %v160 = vadd.f32 0.0, %v159
  %v161 = vpop.f32.mrb[0].mxu0
  %162 = vmatprep.mubr.f32.mxu0 0.0
  %163 = vmatmul.mubr.f32.gmra.mrb[0].mxu0 %v61
  %v164 = vpop.f32.mrb[0].mxu0
  %v165 = vadd.f32 0.0, %v164
  %v166 = vpop.f32.mrb[0].mxu0
  %167 = vdwg.mxu0
  %168 = vst [vmem:[#allocation2] sm:$0xff] %v130
  %169 = vst [vmem:[#allocation2 + $0x8] sm:$0xff] %v135
  %170 = vst [vmem:[#allocation2 + $0x10] sm:$0xff] %v140
  %171 = vst [vmem:[#allocation2 + $0x18] sm:$0xff] %v145
  %172 = vst [vmem:[#allocation2 + $0x20] sm:$0xff] %v150
  %173 = vst [vmem:[#allocation2 + $0x28] sm:$0xff] %v155
  %174 = vst [vmem:[#allocation2 + $0x30] sm:$0xff] %v160
  %175 = vst [vmem:[#allocation2 + $0x38] sm:$0xff] %v165
  %v176 = vld [vmem:[%s4] sm:$0x1]
  %v178 = vlaneseq
  %v179 = vshrl.u32 %v178, 7
  %v180 = vsub.s32 0, %v179
  %v181 = vrot.slane %v176, %v180
  %v183 = vld [vmem:[%s5] sm:$0x1]
  %v185 = vlaneseq
  %v186 = vshrl.u32 %v185, 7
  %v187 = vsub.s32 0, %v186
  %v188 = vrot.slane %v183, %v187
  %v190 = vld [vmem:[#allocation3] sm:$0xff]
  %v191 = vld [vmem:[#allocation2] sm:$0xff]
  %v192 = vmul.f32 %v181, %v190
  %193 = vrot.lane.b32.xlu0 %v190, 64
  %v194 = vpop.permute.xlu0 %193
  %v195 = vmul.f32 %v188, %v194
  %v196 = vadd.f32 %v192, %v195
  %v197 = vadd.f32 %v196, %v191
  %198 = vst [vmem:[#allocation2] sm:$0xff] %v197
  %s199 = scalar_lea.vmem [#allocation2], 8
  %v200 = vld [vmem:[%s199] sm:$0xff]
  %v201 = vmul.f32 %v181, %v197
  %202 = vrot.lane.b32.xlu0 %v197, 64
  %v203 = vpop.permute.xlu0 %202
  %v204 = vmul.f32 %v188, %v203
  %v205 = vadd.f32 %v201, %v204
  %v206 = vadd.f32 %v205, %v200
  %207 = vst [vmem:[%s199] sm:$0xff] %v206
  %s208 = scalar_lea.vmem [#allocation2], 16
  %v209 = vld [vmem:[%s208] sm:$0xff]
  %v210 = vmul.f32 %v181, %v206
  %211 = vrot.lane.b32.xlu0 %v206, 64
  %v212 = vpop.permute.xlu0 %211
  %v213 = vmul.f32 %v188, %v212
  %v214 = vadd.f32 %v210, %v213
  %v215 = vadd.f32 %v214, %v209
  %216 = vst [vmem:[%s208] sm:$0xff] %v215
  %s217 = scalar_lea.vmem [#allocation2], 24
  %v218 = vld [vmem:[%s217] sm:$0xff]
  %v219 = vmul.f32 %v181, %v215
  %220 = vrot.lane.b32.xlu0 %v215, 64
  %v221 = vpop.permute.xlu0 %220
  %v222 = vmul.f32 %v188, %v221
  %v223 = vadd.f32 %v219, %v222
  %v224 = vadd.f32 %v223, %v218
  %225 = vst [vmem:[%s217] sm:$0xff] %v224
  %s226 = scalar_lea.vmem [#allocation2], 32
  %v227 = vld [vmem:[%s226] sm:$0xff]
  %v228 = vmul.f32 %v181, %v224
  %229 = vrot.lane.b32.xlu0 %v224, 64
  %v230 = vpop.permute.xlu0 %229
  %v231 = vmul.f32 %v188, %v230
  %v232 = vadd.f32 %v228, %v231
  %v233 = vadd.f32 %v232, %v227
  %234 = vst [vmem:[%s226] sm:$0xff] %v233
  %s235 = scalar_lea.vmem [#allocation2], 40
  %v236 = vld [vmem:[%s235] sm:$0xff]
  %v237 = vmul.f32 %v181, %v233
  %238 = vrot.lane.b32.xlu0 %v233, 64
  %v239 = vpop.permute.xlu0 %238
  %v240 = vmul.f32 %v188, %v239
  %v241 = vadd.f32 %v237, %v240
  %v242 = vadd.f32 %v241, %v236
  %243 = vst [vmem:[%s235] sm:$0xff] %v242
  %s244 = scalar_lea.vmem [#allocation2], 48
  %v245 = vld [vmem:[%s244] sm:$0xff]
  %v246 = vmul.f32 %v181, %v242
  %247 = vrot.lane.b32.xlu0 %v242, 64
  %v248 = vpop.permute.xlu0 %247
  %v249 = vmul.f32 %v188, %v248
  %v250 = vadd.f32 %v246, %v249
  %v251 = vadd.f32 %v250, %v245
  %252 = vst [vmem:[%s244] sm:$0xff] %v251
  %s253 = scalar_lea.vmem [#allocation2], 56
  %v254 = vld [vmem:[%s253] sm:$0xff]
  %v255 = vmul.f32 %v181, %v251
  %256 = vrot.lane.b32.xlu0 %v251, 64
  %v257 = vpop.permute.xlu0 %256
  %v258 = vmul.f32 %v188, %v257
  %v259 = vadd.f32 %v255, %v258
  %v260 = vadd.f32 %v259, %v254
  %261 = vst [vmem:[%s253] sm:$0xff] %v260
  %262 = vst [vmem:[#allocation3] sm:$0xff] %v260
  %v263 = vld [vmem:[#allocation2] sm:$0xff]
  %v264 = vld [vmem:[#allocation2 + $0x8] sm:$0xff]
  %v265 = vld [vmem:[#allocation2 + $0x10] sm:$0xff]
  %v266 = vld [vmem:[#allocation2 + $0x18] sm:$0xff]
  %v267 = vld [vmem:[#allocation2 + $0x20] sm:$0xff]
  %v268 = vld [vmem:[#allocation2 + $0x28] sm:$0xff]
  %v269 = vld [vmem:[#allocation2 + $0x30] sm:$0xff]
  %v270 = vld [vmem:[#allocation2 + $0x38] sm:$0xff]
  %v271 = vld [vmem:[%s2] sm:$0xff]
  %v272 = vld [vmem:[%s2 + $0x8] sm:$0xff]
  %v273 = vld [vmem:[%s2 + $0x10] sm:$0xff]
  %v274 = vld [vmem:[%s2 + $0x18] sm:$0xff]
  %v275 = vld [vmem:[%s2 + $0x20] sm:$0xff]
  %v276 = vld [vmem:[%s2 + $0x28] sm:$0xff]
  %v277 = vld [vmem:[%s2 + $0x30] sm:$0xff]
  %v278 = vld [vmem:[%s2 + $0x38] sm:$0xff]
  %v279 = vld [vmem:[%s2 + $0x40] sm:$0xff]
  %v280 = vld [vmem:[%s2 + $0x48] sm:$0xff]
  %v281 = vld [vmem:[%s2 + $0x50] sm:$0xff]
  %v282 = vld [vmem:[%s2 + $0x58] sm:$0xff]
  %v283 = vld [vmem:[%s2 + $0x60] sm:$0xff]
  %v284 = vld [vmem:[%s2 + $0x68] sm:$0xff]
  %v285 = vld [vmem:[%s2 + $0x70] sm:$0xff]
  %v286 = vld [vmem:[%s2 + $0x78] sm:$0xff]
  %v287 = vld [vmem:[%s3] sm:$0xff]
  %v288 = vld [vmem:[%s3 + $0x8] sm:$0xff]
  %289 = vmatprep.subr.mxu0 0.0
  %290 = vmatpush1.msra.mxu0 %v287
  %291 = vmatprep.subr.mxu0 0.0
  %292 = vmatpush1.msra.mxu0 %v288
  %293 = vmatprep.subr.mxu0 0.0
  %294 = vmatpush1.msra.mxu0 0.0
  %295 = vmatprep.subr.mxu0 0.0
  %296 = vmatpush1.msra.mxu0 0.0
  %297 = vmatprep.subr.mxu0 0.0
  %298 = vmatpush1.msra.mxu0 0.0
  %299 = vmatprep.subr.mxu0 0.0
  %300 = vmatpush1.msra.mxu0 0.0
  %301 = vmatprep.subr.mxu0 0.0
  %302 = vmatpush1.msra.mxu0 0.0
  %303 = vmatprep.subr.mxu0 0.0
  %304 = vmatpush1.msra.mxu0 0.0
  %305 = vmatprep.subr.mxu0 0.0
  %306 = vmatpush1.msra.mxu0 0.0
  %307 = vmatprep.subr.mxu0 0.0
  %308 = vmatpush1.msra.mxu0 0.0
  %309 = vmatprep.subr.mxu0 0.0
  %310 = vmatpush1.msra.mxu0 0.0
  %311 = vmatprep.subr.mxu0 0.0
  %312 = vmatpush1.msra.mxu0 0.0
  %313 = vmatprep.subr.mxu0 0.0
  %314 = vmatpush1.msra.mxu0 0.0
  %315 = vmatprep.subr.mxu0 0.0
  %316 = vmatpush1.msra.mxu0 0.0
  %317 = vmatprep.subr.mxu0 0.0
  %318 = vmatpush1.msra.mxu0 0.0
  %319 = vmatprep.subr.mxu0 0.0
  %320 = vmatpush1.msra.mxu0 0.0
  %321 = vmatprep.subr.mxu0 0.0
  %322 = vmatpush1.msra.mxu0 0.0
  %323 = vmatprep.subr.mxu0 0.0
  %324 = vmatpush1.msra.mxu0 0.0
  %325 = vmatprep.subr.mxu0 0.0
  %326 = vmatpush1.msra.mxu0 0.0
  %327 = vmatprep.subr.mxu0 0.0
  %328 = vmatpush1.msra.mxu0 0.0
  %329 = vmatprep.subr.mxu0 0.0
  %330 = vmatpush1.msra.mxu0 0.0
  %331 = vmatprep.subr.mxu0 0.0
  %332 = vmatpush1.msra.mxu0 0.0
  %333 = vmatprep.subr.mxu0 0.0
  %334 = vmatpush1.msra.mxu0 0.0
  %335 = vmatprep.subr.mxu0 0.0
  %336 = vmatpush1.msra.mxu0 0.0
  %337 = vmatprep.subr.mxu0 0.0
  %338 = vmatpush1.msra.mxu0 0.0
  %339 = vmatprep.subr.mxu0 0.0
  %340 = vmatpush1.msra.mxu0 0.0
  %341 = vmatprep.subr.mxu0 0.0
  %342 = vmatpush1.msra.mxu0 0.0
  %343 = vmatprep.subr.mxu0 0.0
  %344 = vmatpush1.msra.mxu0 0.0
  %345 = vmatprep.subr.mxu0 0.0
  %346 = vmatpush1.msra.mxu0 0.0
  %347 = vmatprep.subr.mxu0 0.0
  %348 = vmatpush1.msra.mxu0 0.0
  %349 = vmatprep.subr.mxu0 0.0
  %350 = vmatpush1.msra.mxu0 0.0
  %351 = vmatprep.subr.mxu0 0.0
  %352 = vmatpush1.msra.mxu0 0.0
  %353 = vmatprep.mubr.f32.mxu0 0.0
  %354 = vmatmul.mubr.f32.gmra.mrb[0].mxu0 %v40
  %v355 = vpop.f32.mrb[0].mxu0
  %v356 = vadd.f32 0.0, %v355
  %v357 = vpop.f32.mrb[0].mxu0
  %358 = vmatprep.mubr.f32.mxu0 0.0
  %359 = vmatmul.mubr.f32.gmra.mrb[0].mxu0 %v43
  %v360 = vpop.f32.mrb[0].mxu0
  %v361 = vadd.f32 0.0, %v360
  %v362 = vpop.f32.mrb[0].mxu0
  %363 = vmatprep.mubr.f32.mxu0 0.0
  %364 = vmatmul.mubr.f32.gmra.mrb[0].mxu0 %v46
  %v365 = vpop.f32.mrb[0].mxu0
  %v366 = vadd.f32 0.0, %v365
  %v367 = vpop.f32.mrb[0].mxu0
  %368 = vmatprep.mubr.f32.mxu0 0.0
  %369 = vmatmul.mubr.f32.gmra.mrb[0].mxu0 %v49
  %v370 = vpop.f32.mrb[0].mxu0
  %v371 = vadd.f32 0.0, %v370
  %v372 = vpop.f32.mrb[0].mxu0
  %373 = vmatprep.mubr.f32.mxu0 0.0
  %374 = vmatmul.mubr.f32.gmra.mrb[0].mxu0 %v52
  %v375 = vpop.f32.mrb[0].mxu0
  %v376 = vadd.f32 0.0, %v375
  %v377 = vpop.f32.mrb[0].mxu0
  %378 = vmatprep.mubr.f32.mxu0 0.0
  %379 = vmatmul.mubr.f32.gmra.mrb[0].mxu0 %v55
  %v380 = vpop.f32.mrb[0].mxu0
  %v381 = vadd.f32 0.0, %v380
  %v382 = vpop.f32.mrb[0].mxu0
  %383 = vmatprep.mubr.f32.mxu0 0.0
  %384 = vmatmul.mubr.f32.gmra.mrb[0].mxu0 %v58
  %v385 = vpop.f32.mrb[0].mxu0
  %v386 = vadd.f32 0.0, %v385
  %v387 = vpop.f32.mrb[0].mxu0
  %388 = vmatprep.mubr.f32.mxu0 0.0
  %389 = vmatmul.mubr.f32.gmra.mrb[0].mxu0 %v61
  %v390 = vpop.f32.mrb[0].mxu0
  %v391 = vadd.f32 0.0, %v390
  %v392 = vpop.f32.mrb[0].mxu0
  %393 = vdwg.mxu0
  %394 = vmatprep.subr.mxu0 0.0
  %395 = vmatpush1.msra.mxu0 %v271
  %396 = vmatprep.subr.mxu0 0.0
  %397 = vmatpush1.msra.mxu0 %v272
  %398 = vmatprep.subr.mxu0 0.0
  %399 = vmatpush1.msra.mxu0 %v273
  %400 = vmatprep.subr.mxu0 0.0
  %401 = vmatpush1.msra.mxu0 %v274
  %402 = vmatprep.subr.mxu0 0.0
  %403 = vmatpush1.msra.mxu0 %v275
  %404 = vmatprep.subr.mxu0 0.0
  %405 = vmatpush1.msra.mxu0 %v276
  %406 = vmatprep.subr.mxu0 0.0
  %407 = vmatpush1.msra.mxu0 %v277
  %408 = vmatprep.subr.mxu0 0.0
  %409 = vmatpush1.msra.mxu0 %v278
  %410 = vmatprep.subr.mxu0 0.0
  %411 = vmatpush1.msra.mxu0 %v279
  %412 = vmatprep.subr.mxu0 0.0
  %413 = vmatpush1.msra.mxu0 %v280
  %414 = vmatprep.subr.mxu0 0.0
  %415 = vmatpush1.msra.mxu0 %v281
  %416 = vmatprep.subr.mxu0 0.0
  %417 = vmatpush1.msra.mxu0 %v282
  %418 = vmatprep.subr.mxu0 0.0
  %419 = vmatpush1.msra.mxu0 %v283
  %420 = vmatprep.subr.mxu0 0.0
  %421 = vmatpush1.msra.mxu0 %v284
  %422 = vmatprep.subr.mxu0 0.0
  %423 = vmatpush1.msra.mxu0 %v285
  %424 = vmatprep.subr.mxu0 0.0
  %425 = vmatpush1.msra.mxu0 %v286
  %426 = vmatprep.subr.mxu0 0.0
  %427 = vmatpush1.msra.mxu0 0.0
  %428 = vmatprep.subr.mxu0 0.0
  %429 = vmatpush1.msra.mxu0 0.0
  %430 = vmatprep.subr.mxu0 0.0
  %431 = vmatpush1.msra.mxu0 0.0
  %432 = vmatprep.subr.mxu0 0.0
  %433 = vmatpush1.msra.mxu0 0.0
  %434 = vmatprep.subr.mxu0 0.0
  %435 = vmatpush1.msra.mxu0 0.0
  %436 = vmatprep.subr.mxu0 0.0
  %437 = vmatpush1.msra.mxu0 0.0
  %438 = vmatprep.subr.mxu0 0.0
  %439 = vmatpush1.msra.mxu0 0.0
  %440 = vmatprep.subr.mxu0 0.0
  %441 = vmatpush1.msra.mxu0 0.0
  %442 = vmatprep.subr.mxu0 0.0
  %443 = vmatpush1.msra.mxu0 0.0
  %444 = vmatprep.subr.mxu0 0.0
  %445 = vmatpush1.msra.mxu0 0.0
  %446 = vmatprep.subr.mxu0 0.0
  %447 = vmatpush1.msra.mxu0 0.0
  %448 = vmatprep.subr.mxu0 0.0
  %449 = vmatpush1.msra.mxu0 0.0
  %450 = vmatprep.subr.mxu0 0.0
  %451 = vmatpush1.msra.mxu0 0.0
  %452 = vmatprep.subr.mxu0 0.0
  %453 = vmatpush1.msra.mxu0 0.0
  %454 = vmatprep.subr.mxu0 0.0
  %455 = vmatpush1.msra.mxu0 0.0
  %456 = vmatprep.subr.mxu0 0.0
  %457 = vmatpush1.msra.mxu0 0.0
  %458 = vmatprep.mubr.f32.mxu0 0.0
  %459 = vmatmul.mubr.f32.gmra.mrb[0].mxu0 %v263
  %v460 = vpop.f32.mrb[0].mxu0
  %v461 = vadd.f32 %v356, %v460
  %v462 = vpop.f32.mrb[0].mxu0
  %463 = vmatprep.mubr.f32.mxu0 0.0
  %464 = vmatmul.mubr.f32.gmra.mrb[0].mxu0 %v264
  %v465 = vpop.f32.mrb[0].mxu0
  %v466 = vadd.f32 %v361, %v465
  %v467 = vpop.f32.mrb[0].mxu0
  %468 = vmatprep.mubr.f32.mxu0 0.0
  %469 = vmatmul.mubr.f32.gmra.mrb[0].mxu0 %v265
  %v470 = vpop.f32.mrb[0].mxu0
  %v471 = vadd.f32 %v366, %v470
  %v472 = vpop.f32.mrb[0].mxu0
  %473 = vmatprep.mubr.f32.mxu0 0.0
  %474 = vmatmul.mubr.f32.gmra.mrb[0].mxu0 %v266
  %v475 = vpop.f32.mrb[0].mxu0
  %v476 = vadd.f32 %v371, %v475
  %v477 = vpop.f32.mrb[0].mxu0
  %478 = vmatprep.mubr.f32.mxu0 0.0
  %479 = vmatmul.mubr.f32.gmra.mrb[0].mxu0 %v267
  %v480 = vpop.f32.mrb[0].mxu0
  %v481 = vadd.f32 %v376, %v480
  %v482 = vpop.f32.mrb[0].mxu0
  %483 = vmatprep.mubr.f32.mxu0 0.0
  %484 = vmatmul.mubr.f32.gmra.mrb[0].mxu0 %v268
  %v485 = vpop.f32.mrb[0].mxu0
  %v486 = vadd.f32 %v381, %v485
  %v487 = vpop.f32.mrb[0].mxu0
  %488 = vmatprep.mubr.f32.mxu0 0.0
  %489 = vmatmul.mubr.f32.gmra.mrb[0].mxu0 %v269
  %v490 = vpop.f32.mrb[0].mxu0
  %v491 = vadd.f32 %v386, %v490
  %v492 = vpop.f32.mrb[0].mxu0
  %493 = vmatprep.mubr.f32.mxu0 0.0
  %494 = vmatmul.mubr.f32.gmra.mrb[0].mxu0 %v270
  %v495 = vpop.f32.mrb[0].mxu0
  %v496 = vadd.f32 %v391, %v495
  %v497 = vpop.f32.mrb[0].mxu0
  %498 = vdwg.mxu0
  %499 = vst.msk [vmem:[%s6] sm:$0xff] %vm38, %v461
  %500 = vst.msk [vmem:[%s6 + $0x8] sm:$0xff] %vm38, %v466
  %501 = vst.msk [vmem:[%s6 + $0x10] sm:$0xff] %vm38, %v471
  %502 = vst.msk [vmem:[%s6 + $0x18] sm:$0xff] %vm38, %v476
  %503 = vst.msk [vmem:[%s6 + $0x20] sm:$0xff] %vm38, %v481
  %504 = vst.msk [vmem:[%s6 + $0x28] sm:$0xff] %vm38, %v486
  %505 = vst.msk [vmem:[%s6 + $0x30] sm:$0xff] %vm38, %v491
  %506 = vst.msk [vmem:[%s6 + $0x38] sm:$0xff] %vm38, %v496
  // Predicated region
  $region30: #{tpu_custom_call.1} parent=0 // pred_check
    _
  $region31: #{tpu_custom_call.1} parent=0 // pred_check_branch
    %508 = sbr.rel (0) target = $region33
  $region32: #{tpu_custom_call.1} parent=0 // pred_region
    _
  $region33: #{tpu_custom_call.1} parent=0 // pred_fallthru
    _
  // Predicated region
  $region34: #{tpu_custom_call.1} parent=0 // pred_check
    _
  $region35: #{tpu_custom_call.1} parent=0 // pred_check_branch
    %510 = sbr.rel (0) target = $region37
  $region36: #{tpu_custom_call.1} parent=0 // pred_region
    _
  $region37: #{tpu_custom_call.1} parent=0 // pred_fallthru
    _

</llo_original>
